<compile_context>
chip_gen: v7x
topology: tpu7x:2x2x1
jax: 0.10.0
libtpu: 0.0.40
codegen_flags: <defaults>
</compile_context>

<pallas_src>
import jax
import jax.numpy as jnp
from jax.experimental import pallas as pl
from jax.experimental.pallas import tpu as pltpu

LANES = 128               # vreg lane width (same on v5e / v6e / v7x)
SUBLANE_ROUND = 32        # covers f32 (8), bf16 (16), int8/fp8 (32) packing
TARGET_BLOCK_BYTES = 2 * 1024 * 1024   # ~2 MiB per block per operand
MIN_GRID_STEPS = 4        # keep the parallel axis useful on v7x (2 TCs)


def _identity_kernel(x_ref, o_ref):
    # Straight tile copy: one full-width load + one full-width store per block.
    o_ref[...] = x_ref[...]


def _choose_cols(n):
    """Widest lane-dense column count (multiple of 128) that divides n."""
    for cols in (1024, 512, 256, 128):
        if n % cols == 0:
            return cols
    return None


def identity_forward(x, *, use_pallas=True):
    """Identity forward pass.

    The optimal implementation of Identity is simply returning `x` (zero HBM
    traffic); pass `use_pallas=False` for that.  With `use_pallas=True` (when
    a Pallas call boundary is mandated) the op is a lane-dense tiled copy
    whose output aliases the input buffer, so no fresh HBM output is
    allocated when the caller donates `x`.
    """
    if not use_pallas or x.size == 0:
        return x

    n = x.size
    cols = _choose_cols(n)
    if cols is None:
        # Lane-ragged size: padding + slicing back would add two extra HBM
        # passes just to round-trip a copy.  Identity is exact either way, so
        # return the input directly (review item #1).
        return x

    orig_shape = x.shape
    rows = n // cols
    dsize = jnp.dtype(x.dtype).itemsize

    # ~TARGET_BLOCK_BYTES per block; in+out double-buffered stays << 32 MiB
    # scoped VMEM even on v7x (64 MiB physical).
    tile_rows = max(1, TARGET_BLOCK_BYTES // (cols * dsize))

    if rows <= tile_rows:
        # Whole array fits one block: block shape == full array dims (legal
        # even when rows is not a sublane multiple).
        block_rows = rows
        grid_rows = 1
    else:
        # Keep at least MIN_GRID_STEPS grid steps so the "parallel" axis can
        # shard across v7x's two TensorCores; round to a sublane multiple so
        # stores stay unmasked for every dtype.
        tile_rows = min(tile_rows, pl.cdiv(rows, MIN_GRID_STEPS))
        tile_rows = max(SUBLANE_ROUND, (tile_rows // SUBLANE_ROUND) * SUBLANE_ROUND)
        block_rows = tile_rows
        grid_rows = pl.cdiv(rows, tile_rows)   # masked partial last block, no pad

    x2d = x.reshape(rows, cols)

    out2d = pl.pallas_call(
        _identity_kernel,
        out_shape=jax.ShapeDtypeStruct((rows, cols), x.dtype),
        grid_spec=pltpu.PrefetchScalarGridSpec(
            num_scalar_prefetch=0,
            grid=(grid_rows,),
            in_specs=[pl.BlockSpec((block_rows, cols), lambda i: (i, 0))],
            out_specs=pl.BlockSpec((block_rows, cols), lambda i: (i, 0)),
        ),
        # Output reuses the input HBM buffer (caller may donate x); the copy
        # writes identical values, so this is value-exact.
        input_output_aliases={0: 0},
        compiler_params=pltpu.CompilerParams(
            dimension_semantics=("parallel",),
            vmem_limit_bytes=32 * 1024 * 1024,
        ),
    )(x2d)

    return out2d.reshape(orig_shape)


if __name__ == "__main__":
    # Small shapes consistent with the module's use inside PixelCNN++:
    # batch=2, channels=4, spatial 16x16.
    key = jax.random.PRNGKey(0)
    x = jax.random.normal(key, (2, 4, 16, 16), dtype=jnp.float32)

    out = jax.block_until_ready(identity_forward(x))

    assert out.shape == x.shape, out.shape
    assert out.dtype == x.dtype, out.dtype
    assert bool(jnp.array_equal(out, x)), float(jnp.max(jnp.abs(out - x)))

    print("KERNEL_OK")
</pallas_src>

<mosaic_0001>
module attributes {stable_mosaic.version = 11 : i64} {
  func.func @_identity_kernel(%arg0: i32, %arg1: memref<2x1024xf32, #tpu.memory_space<vmem>>, %arg2: memref<2x1024xf32, #tpu.memory_space<vmem>>) attributes {dimension_semantics = [#tpu.dimension_semantics<parallel>], iteration_bounds = array<i64: 1>, scalar_prefetch = 0 : i64, scratch_operands = 0 : i64, tpu.core_type = #tpu.core_type<tc>, window_params = [{transform_indices = @transform_0, window_bounds = array<i64: 2, 1024>}, {transform_indices = @transform_1, window_bounds = array<i64: 2, 1024>}]} {
    %c0 = arith.constant 0 : index
    %c0_0 = arith.constant 0 : index
    %0 = vector.load %arg1[%c0, %c0_0] : memref<2x1024xf32, #tpu.memory_space<vmem>>, vector<2x1024xf32>
    %c0_1 = arith.constant 0 : index
    %c0_2 = arith.constant 0 : index
    %1 = vector.load %arg2[%c0_1, %c0_2] : memref<2x1024xf32, #tpu.memory_space<vmem>>, vector<2x1024xf32>
    tpu.vector_store %arg2[%c0_1, %c0_2], %0 {strides = array<i32>} : memref<2x1024xf32, #tpu.memory_space<vmem>>, vector<2x1024xf32>,
    return
  }
  func.func @transform_0(%arg0: i32) -> (i32, i32) {
    %c0_i32 = arith.constant 0 : i32
    %c0_i32_0 = arith.constant 0 : i32
    return %arg0, %c0_i32 : i32, i32
  }
  func.func @transform_1(%arg0: i32) -> (i32, i32) {
    %c0_i32 = arith.constant 0 : i32
    %c0_i32_0 = arith.constant 0 : i32
    return %arg0, %c0_i32 : i32, i32
  }
}

</mosaic_0001>

<llo_original>
// kernel: tpu_custom_call.1
$region0: #{tpu_custom_call.1}
  #allocation0 [shape = 'u32[]', space=smem, size = 0x4, offset = 0x4, fixed_abs, tag = 'smem constant byte address 0x4 - core index']
  #allocation1 [shape = 'u32[144,128]{1,0:T(1,128)}', space=vmem, size = 0x12000, scoped, tag = 'internal scratch']
  %s0 = inlined_call_operand.hbm [shape: f32[2,1024], index: 0, kind: input, shape index: {}, may-alias: {0,1}]
  %s1 = inlined_call_operand.hbm [shape: f32[2,1024], index: 1, kind: output, shape index: {}, may-alias: {0,1}]
  %s2 = sld [smem:[#allocation0]]
  $region18: #{tpu_custom_call.1} parent=0
    _
  %s4 = ssub.s32 1, %s2
  %s5 = scalar_select 0, %s4, %s2
  $region1: #{tpu_custom_call.1} parent=0
    #allocation2 [shape = 'u8[8192]{0}', space=vmem, size = 0x2000, scoped, tag = 'input window, operand 0, single buffered']
    #allocation3 [shape = 's32[1]{0}', space=sflag, size = 0x4, scoped, tag = 'scoped memory for tpu_custom_call.1']
    #allocation4 [shape = 's32[1]{0}', space=sflag, size = 0x4, scoped, tag = 'scoped memory for tpu_custom_call.1']
    #allocation5 [shape = 'u8[8192]{0}', space=vmem, size = 0x2000, scoped, tag = 'output window, operand 0, single buffered']
    %6 = vsyncpa [#allocation3], 0
    %7 = vsyncpa [#allocation4], 0
    // Predicated region
    $region2: #{tpu_custom_call.1} parent=1 // pred_check
      _
    $region3: #{tpu_custom_call.1} parent=1 // pred_check_branch
      %9 = sbr.rel (0) target = $region5
    $region4: #{tpu_custom_call.1} parent=1 // pred_region
      %s11 = ssub.s32 256, 256
      %12 = vsyncadd [#allocation3], %s11
      %s14 = sshll.u32 [#allocation2], 4
      %s15 = int_to_ptr.vmem [resolvable:$true] %s14
      %17 = dma.hbm_to_vmem [thread:$0]  %s0, 256, %s15, [#allocation3]
    $region5: #{tpu_custom_call.1} parent=1 // pred_fallthru
      _
    // Predicated region
    $region6: #{tpu_custom_call.1} parent=1 // pred_check
      _
    $region7: #{tpu_custom_call.1} parent=1 // pred_check_branch
      %19 = sbr.rel (0) target = $region9
    $region8: #{tpu_custom_call.1} parent=1 // pred_region
      %20 = dma.done [#allocation3], 256
    $region9: #{tpu_custom_call.1} parent=1 // pred_fallthru
      _
    %v21 = vld [vmem:[#allocation2] sm:$0xff]
    %v22 = vld [vmem:[#allocation2 + $0x8] sm:$0xff]
    %23 = vst [vmem:[#allocation5] sm:$0xff] %v21
    %24 = vst [vmem:[#allocation5 + $0x8] sm:$0xff] %v22
    // Predicated region
    $region10: #{tpu_custom_call.1} parent=1 // pred_check
      _
    $region11: #{tpu_custom_call.1} parent=1 // pred_check_branch
      %26 = sbr.rel (0) target = $region13
    $region12: #{tpu_custom_call.1} parent=1 // pred_region
      %s28 = ssub.s32 256, 256
      %29 = vsyncadd [#allocation4], %s28
      %s31 = sshll.u32 [#allocation5], 4
      %s32 = int_to_ptr.vmem [resolvable:$true] %s31
      %34 = dma.vmem_to_hbm [thread:$0]  %s32, 256, %s1, [#allocation4]
    $region13: #{tpu_custom_call.1} parent=1 // pred_fallthru
      _
    // Predicated region
    $region14: #{tpu_custom_call.1} parent=1 // pred_check
      _
    $region15: #{tpu_custom_call.1} parent=1 // pred_check_branch
      %36 = sbr.rel (0) target = $region17
    $region16: #{tpu_custom_call.1} parent=1 // pred_region
      %37 = dma.done [#allocation4], 256
    $region17: #{tpu_custom_call.1} parent=1 // pred_fallthru
      _
    %38 = vsyncpa [#allocation3], 1
    %39 = vsyncpa [#allocation4], 1

</llo_original>
